<compile_context>
chip_gen: v6e
topology: v6e:2x2x1
jax: 0.10.0
libtpu: 0.0.40
codegen_flags: <defaults>
</compile_context>

<pallas_src>
import jax
import jax.numpy as jnp
from jax import lax
from jax.experimental import pallas as pl
from jax.experimental.pallas import tpu as pltpu


def _round_up(x: int, m: int) -> int:
    return pl.cdiv(x, m) * m


def mlp_kernel(x_ref, w1_ref, b1_ref, w2t_ref, b2_ref, o_ref):
    # fc1 on the MXU: cast f32 activations to bf16 in-kernel (VPU), accumulate in f32.
    x_bf16 = x_ref[...].astype(jnp.bfloat16)                     # (TB, 23) bf16
    h = jnp.dot(x_bf16, w1_ref[...],
                preferred_element_type=jnp.float32)              # (TB, 64) f32
    h = jnp.maximum(h + b1_ref[...], 0.0)                        # bias + ReLU, f32 VPU

    # fc2 (out features = 1) as A @ B^T on the MXU: contract the hidden dim of both
    # operands -> (1, TB), batch lane-dense, no explicit (TB, 64) transpose of h.
    z = lax.dot_general(w2t_ref[...], h,
                        dimension_numbers=(((1,), (1,)), ((), ())),
                        preferred_element_type=jnp.float32)      # (1, TB) f32
    z = z + b2_ref[0, 0]                                         # SMEM scalar bias

    # sigmoid: exp on the EUP, exact divide (kernel is mem-bound; cost negligible).
    o_ref[0] = (1.0 / (1.0 + jnp.exp(-z))).astype(o_ref.dtype)   # lane-dense store


def simple_nn_forward(x, w1, b1, w2, b2, *, block_batch=4096):
    """x: (B, 23) f32; w1: (23, 64); b1: (64,) or (1,64); w2: (64,1); b2: scalar-ish."""
    B, F = x.shape
    H = w1.shape[1]

    # Lane-dense batch tile: multiple of 128, capped at block_batch; the grid handles
    # a ragged last tile, so x is never padded or copied.  (For block_batch >~ 8K on
    # v7x, budget against the 32 MiB scoped-VMEM default or raise vmem_limit_bytes.)
    tb = min(block_batch, _round_up(B, 128))
    num_tiles = pl.cdiv(B, tb)

    # Tiny parameter tensors: casting/reshaping here is negligible and fuses upstream.
    w1_bf16 = w1.astype(jnp.bfloat16)                         # (F, H)
    b1_2d = jnp.asarray(b1, jnp.float32).reshape(1, H)        # (1, H)
    w2_t = jnp.asarray(w2, jnp.float32).reshape(1, H)         # (1, H) == w2^T
    b2_2d = jnp.asarray(b2, jnp.float32).reshape(1, 1)        # SMEM scalar

    cost = pl.CostEstimate(
        flops=2 * B * F * H + 2 * B * H,
        transcendentals=B,
        bytes_accessed=B * F * 4 + B * 4 + F * H * 2 + 2 * H * 4 + 4,
    )

    out = pl.pallas_call(
        mlp_kernel,
        out_shape=jax.ShapeDtypeStruct((num_tiles, 1, tb), jnp.float32),
        grid=(num_tiles,),
        in_specs=[
            pl.BlockSpec((tb, F), lambda i: (i, 0)),             # x tile (pipelined)
            pl.BlockSpec((F, H), lambda i: (0, 0)),              # w1 bf16 (resident)
            pl.BlockSpec((1, H), lambda i: (0, 0)),              # b1 (resident)
            pl.BlockSpec((1, H), lambda i: (0, 0)),              # w2^T (resident)
            pl.BlockSpec(memory_space=pltpu.MemorySpace.SMEM),   # b2 scalar
        ],
        out_specs=pl.BlockSpec((1, 1, tb), lambda i: (i, 0, 0)),
        compiler_params=pltpu.CompilerParams(
            dimension_semantics=("parallel",)),
        cost_estimate=cost,
    )(x, w1_bf16, b1_2d, w2_t, b2_2d)

    # (num_tiles, 1, tb) -> (B, 1); drops the ragged-tail garbage rows.
    return out.reshape(num_tiles * tb)[:B].reshape(B, 1)


def init_params(key):
    # Deterministic init mimicking nn.Linear's uniform(-1/sqrt(fan_in), 1/sqrt(fan_in)).
    k1, k2, k3, k4 = jax.random.split(key, 4)
    bound1 = 1.0 / jnp.sqrt(23.0)
    bound2 = 1.0 / jnp.sqrt(64.0)
    w1 = jax.random.uniform(k1, (23, 64), jnp.float32, -bound1, bound1)
    b1 = jax.random.uniform(k2, (1, 64), jnp.float32, -bound1, bound1)
    w2 = jax.random.uniform(k3, (64, 1), jnp.float32, -bound2, bound2)
    b2 = jax.random.uniform(k4, (1, 1), jnp.float32, -bound2, bound2)
    return w1, b1, w2, b2


if __name__ == "__main__":
    key = jax.random.PRNGKey(0)
    kx, kp = jax.random.split(key)
    w1, b1, w2, b2 = init_params(kp)

    def ref_forward(x):
        # Reference matching the kernel's bf16 quantization of the fc1 MXU operands.
        xr = x.astype(jnp.bfloat16).astype(jnp.float32)
        w1r = w1.astype(jnp.bfloat16).astype(jnp.float32)
        h = jnp.maximum(xr @ w1r + b1, 0.0)
        return jax.nn.sigmoid(h @ w2 + b2)

    # Small demo batch (exercises a single ragged tile: 8 valid rows of a 128-row tile).
    B = 8
    x = jax.random.normal(kx, (B, 23), jnp.float32)
    out = simple_nn_forward(x, w1, b1, w2, b2)
    jax.block_until_ready(out)
    assert out.shape == (B, 1)
    assert jnp.allclose(out, ref_forward(x), atol=5e-3, rtol=0.0)

    # Multi-tile + ragged-tail case (3 tiles of 128 rows, last one partial).
    B2 = 300
    x2 = jax.random.normal(kx, (B2, 23), jnp.float32)
    out2 = simple_nn_forward(x2, w1, b1, w2, b2, block_batch=128)
    jax.block_until_ready(out2)
    assert out2.shape == (B2, 1)
    assert jnp.allclose(out2, ref_forward(x2), atol=5e-3, rtol=0.0)

    print("KERNEL_OK")
</pallas_src>

<mosaic_0001>
module attributes {stable_mosaic.version = 11 : i64} {
  func.func @mlp_kernel(%arg0: i32, %arg1: memref<128x23xf32, #tpu.memory_space<vmem>>, %arg2: memref<23x64xbf16, #tpu.memory_space<vmem>>, %arg3: memref<1x64xf32, #tpu.memory_space<vmem>>, %arg4: memref<1x64xf32, #tpu.memory_space<vmem>>, %arg5: memref<1x1xf32, #tpu.memory_space<smem>>, %arg6: memref<1x1x128xf32, #tpu.memory_space<vmem>>) attributes {dimension_semantics = [#tpu.dimension_semantics<parallel>], iteration_bounds = array<i64: 1>, scalar_prefetch = 0 : i64, scratch_operands = 0 : i64, tpu.core_type = #tpu.core_type<tc>, window_params = [{transform_indices = @transform_0, window_bounds = array<i64: 128, 23>}, {pipeline_mode = #tpu.pipeline_mode<synchronous>, transform_indices = @transform_1, window_bounds = array<i64: 23, 64>}, {pipeline_mode = #tpu.pipeline_mode<synchronous>, transform_indices = @transform_2, window_bounds = array<i64: 1, 64>}, {pipeline_mode = #tpu.pipeline_mode<synchronous>, transform_indices = @transform_3, window_bounds = array<i64: 1, 64>}, {transform_indices = @transform_4, window_bounds = array<i64: 1, 1>}, {transform_indices = @transform_5, window_bounds = array<i64: 1, 1, 128>}]} {
    %c0 = arith.constant 0 : index
    %c0_0 = arith.constant 0 : index
    %0 = vector.load %arg1[%c0, %c0_0] : memref<128x23xf32, #tpu.memory_space<vmem>>, vector<128x23xf32>
    %1 = arith.truncf %0 : vector<128x23xf32> to vector<128x23xbf16>
    %c0_1 = arith.constant 0 : index
    %c0_2 = arith.constant 0 : index
    %2 = vector.load %arg2[%c0_1, %c0_2] : memref<23x64xbf16, #tpu.memory_space<vmem>>, vector<23x64xbf16>
    %cst = arith.constant dense<0.000000e+00> : vector<128x64xf32>
    %3 = tpu.matmul %1, %2, %cst {dimension_numbers = #tpu.dot_dimension_numbers<[1], [0], [0], [1], [0, 0, 1, 1], [], []>} : vector<128x23xbf16>, vector<23x64xbf16>, vector<128x64xf32> -> vector<128x64xf32>
    %c0_3 = arith.constant 0 : index
    %c0_4 = arith.constant 0 : index
    %4 = vector.load %arg3[%c0_3, %c0_4] : memref<1x64xf32, #tpu.memory_space<vmem>>, vector<1x64xf32>
    %5 = vector.broadcast %4 : vector<1x64xf32> to vector<128x64xf32>
    %6 = arith.addf %3, %5 : vector<128x64xf32>
    %cst_5 = arith.constant 0.000000e+00 : f32
    %7 = vector.broadcast %cst_5 : f32 to vector<128x64xf32>
    %8 = arith.maximumf %6, %7 : vector<128x64xf32>
    %c0_6 = arith.constant 0 : index
    %c0_7 = arith.constant 0 : index
    %9 = vector.load %arg4[%c0_6, %c0_7] : memref<1x64xf32, #tpu.memory_space<vmem>>, vector<1x64xf32>
    %cst_8 = arith.constant dense<0.000000e+00> : vector<1x128xf32>
    %10 = tpu.matmul %9, %8, %cst_8 {dimension_numbers = #tpu.dot_dimension_numbers<[1], [1], [0], [0], [0, 0, 1, 0], [], []>} : vector<1x64xf32>, vector<128x64xf32>, vector<1x128xf32> -> vector<1x128xf32>
    %c0_9 = arith.constant 0 : index
    %c0_10 = arith.constant 0 : index
    %11 = memref.load %arg5[%c0_9, %c0_10] : memref<1x1xf32, #tpu.memory_space<smem>>
    %12 = vector.broadcast %11 : f32 to vector<1x128xf32>
    %13 = arith.addf %10, %12 : vector<1x128xf32>
    %cst_11 = arith.constant 0.000000e+00 : f32
    %14 = vector.broadcast %cst_11 : f32 to vector<1x128xf32>
    %15 = arith.subf %14, %13 : vector<1x128xf32>
    %16 = math.exp %15 : vector<1x128xf32>
    %cst_12 = arith.constant 1.000000e+00 : f32
    %17 = vector.broadcast %cst_12 : f32 to vector<1x128xf32>
    %18 = arith.addf %17, %16 : vector<1x128xf32>
    %cst_13 = arith.constant 1.000000e+00 : f32
    %19 = vector.broadcast %cst_13 : f32 to vector<1x128xf32>
    %20 = arith.divf %19, %18 : vector<1x128xf32>
    %c0_14 = arith.constant 0 : index
    %c0_15 = arith.constant 0 : index
    %c0_16 = arith.constant 0 : index
    %21 = vector.load %arg6[%c0_14, %c0_15, %c0_16] : memref<1x1x128xf32, #tpu.memory_space<vmem>>, vector<1x1x128xf32>
    %22 = vector.shape_cast %21 : vector<1x1x128xf32> to vector<1x128xf32>
    %23 = vector.shape_cast %20 : vector<1x128xf32> to vector<1x1x128xf32>
    tpu.vector_store %arg6[%c0_14, %c0_15, %c0_16], %23 {strides = array<i32>} : memref<1x1x128xf32, #tpu.memory_space<vmem>>, vector<1x1x128xf32>,
    return
  }
  func.func @transform_0(%arg0: i32) -> (i32, i32) {
    %c0_i32 = arith.constant 0 : i32
    %c0_i32_0 = arith.constant 0 : i32
    return %arg0, %c0_i32 : i32, i32
  }
  func.func @transform_1(%arg0: i32) -> (i32, i32) {
    %c0_i32 = arith.constant 0 : i32
    %c0_i32_0 = arith.constant 0 : i32
    %c0_i32_1 = arith.constant 0 : i32
    return %c0_i32, %c0_i32_0 : i32, i32
  }
  func.func @transform_2(%arg0: i32) -> (i32, i32) {
    %c0_i32 = arith.constant 0 : i32
    %c0_i32_0 = arith.constant 0 : i32
    %c0_i32_1 = arith.constant 0 : i32
    return %c0_i32, %c0_i32_0 : i32, i32
  }
  func.func @transform_3(%arg0: i32) -> (i32, i32) {
    %c0_i32 = arith.constant 0 : i32
    %c0_i32_0 = arith.constant 0 : i32
    %c0_i32_1 = arith.constant 0 : i32
    return %c0_i32, %c0_i32_0 : i32, i32
  }
  func.func @transform_4(%arg0: i32) -> (i32, i32) {
    %c0_i32 = arith.constant 0 : i32
    %c0_i32_0 = arith.constant 0 : i32
    %c0_i32_1 = arith.constant 0 : i32
    return %c0_i32, %c0_i32_0 : i32, i32
  }
  func.func @transform_5(%arg0: i32) -> (i32, i32, i32) {
    %c0_i32 = arith.constant 0 : i32
    %c0_i32_0 = arith.constant 0 : i32
    %c0_i32_1 = arith.constant 0 : i32
    return %arg0, %c0_i32, %c0_i32_0 : i32, i32, i32
  }
}

</mosaic_0001>

<llo_original>
// kernel: tpu_custom_call.1
$region0: #{tpu_custom_call.1}
  #allocation0 [shape = 'u32[]', space=smem, size = 0x4, offset = 0x4, fixed_abs, tag = 'smem constant byte address 0x4 - core index']
  #allocation1 [shape = 'u32[144,128]{1,0:T(1,128)}', space=vmem, size = 0x12000, scoped, tag = 'internal scratch']
  #allocation2 [shape = 'f32[1,1]{1,0:T(1,128)S(6)}', space=smem, size = 0x200, scoped, tag = 'scoped memory for tpu_custom_call.1']
  %s0 = inlined_call_operand.hbm [shape: f32[8,23], index: 0, kind: input, shape index: {}]
  %s1 = inlined_call_operand.hbm [shape: bf16[23,64], index: 1, kind: input, shape index: {}]
  %s2 = inlined_call_operand.vmem [shape: f32[1,64], index: 2, kind: input, shape index: {}]
  %s3 = inlined_call_operand.vmem [shape: f32[1,64], index: 3, kind: input, shape index: {}]
  %s4 = inlined_call_operand.<no memory space> [shape: f32[1,1], index: 4, kind: input, shape index: {}]
  %s5 = inlined_call_operand.hbm [shape: f32[1,1,128], index: 5, kind: output, shape index: {}]
  %s6 = sld [smem:[#allocation0]]
  $region38: #{tpu_custom_call.1} parent=0
    _
  %s8 = ssub.s32 1, %s6
  %s9 = scalar_select 0, %s8, %s6
  %10 = sst [smem:[#allocation2]] %s4
  $region1: #{tpu_custom_call.1} parent=0
    #allocation3 [shape = 'u8[65536]{0}', space=vmem, size = 0x10000, scoped, tag = 'input window, operand 0, single buffered']
    #allocation4 [shape = 's32[1]{0}', space=sflag, size = 0x4, scoped, tag = 'scoped memory for tpu_custom_call.1']
    #allocation5 [shape = 's32[1]{0}', space=sflag, size = 0x4, scoped, tag = 'scoped memory for tpu_custom_call.1']
    #allocation6 [shape = 'u8[6144]{0}', space=vmem, size = 0x1800, scoped, tag = 'input window, operand 1, single buffered']
    #allocation7 [shape = 's32[1]{0}', space=sflag, size = 0x4, scoped, tag = 'scoped memory for tpu_custom_call.1']
    #allocation8 [shape = 'u8[512]{0}', space=vmem, size = 0x400, scoped, tag = 'output window, operand 0, single buffered']
    %11 = vsyncpa [#allocation4], 0
    %12 = vsyncpa [#allocation7], 0
    %13 = vsyncpa [#allocation5], 0
    // Predicated region
    $region2: #{tpu_custom_call.1} parent=1 // pred_check
      _
    $region3: #{tpu_custom_call.1} parent=1 // pred_check_branch
      %15 = sbr.rel (0) target = $region5
    $region4: #{tpu_custom_call.1} parent=1 // pred_region
      %s17 = ssub.s32 2048, 128
      %18 = vsyncadd [#allocation4], %s17
      %s19 = sshll.u32 [#allocation3], 4
      %s20 = int_to_ptr.vmem [resolvable:$true] %s19
      %25 = dma.hbm_to_vmem [thread:$0]  %s0, 128, %s20, [#allocation4], 128, 128, 8
    $region5: #{tpu_custom_call.1} parent=1 // pred_fallthru
      _
    // Predicated region
    $region6: #{tpu_custom_call.1} parent=1 // pred_check
      _
    $region7: #{tpu_custom_call.1} parent=1 // pred_check_branch
      %27 = sbr.rel (0) target = $region9
    $region8: #{tpu_custom_call.1} parent=1 // pred_region
      %s29 = ssub.s32 192, 192
      %30 = vsyncadd [#allocation7], %s29
      %s31 = sshll.u32 [#allocation6], 4
      %s32 = int_to_ptr.vmem [resolvable:$true] %s31
      %37 = dma.hbm_to_vmem [thread:$0]  %s1, 192, %s32, [#allocation7], 64, 64, 4
    $region9: #{tpu_custom_call.1} parent=1 // pred_fallthru
      _
    // Predicated region
    $region10: #{tpu_custom_call.1} parent=1 // pred_check
      _
    $region11: #{tpu_custom_call.1} parent=1 // pred_check_branch
      %39 = sbr.rel (0) target = $region13
    $region12: #{tpu_custom_call.1} parent=1 // pred_region
      _
    $region13: #{tpu_custom_call.1} parent=1 // pred_fallthru
      _
    // Predicated region
    $region14: #{tpu_custom_call.1} parent=1 // pred_check
      _
    $region15: #{tpu_custom_call.1} parent=1 // pred_check_branch
      %41 = sbr.rel (0) target = $region17
    $region16: #{tpu_custom_call.1} parent=1 // pred_region
      _
    $region17: #{tpu_custom_call.1} parent=1 // pred_fallthru
      _
    // Predicated region
    $region18: #{tpu_custom_call.1} parent=1 // pred_check
      _
    $region19: #{tpu_custom_call.1} parent=1 // pred_check_branch
      %43 = sbr.rel (0) target = $region21
    $region20: #{tpu_custom_call.1} parent=1 // pred_region
      _
    $region21: #{tpu_custom_call.1} parent=1 // pred_fallthru
      _
    // Predicated region
    $region22: #{tpu_custom_call.1} parent=1 // pred_check
      _
    $region23: #{tpu_custom_call.1} parent=1 // pred_check_branch
      %45 = sbr.rel (0) target = $region25
    $region24: #{tpu_custom_call.1} parent=1 // pred_region
      %46 = dma.done [#allocation4], 2048
    $region25: #{tpu_custom_call.1} parent=1 // pred_fallthru
      _
    // Predicated region
    $region26: #{tpu_custom_call.1} parent=1 // pred_check
      _
    $region27: #{tpu_custom_call.1} parent=1 // pred_check_branch
      %48 = sbr.rel (0) target = $region29
    $region28: #{tpu_custom_call.1} parent=1 // pred_region
      %49 = dma.done [#allocation7], 192
    $region29: #{tpu_custom_call.1} parent=1 // pred_fallthru
      _
    %v51 = vld [vmem:[#allocation3] sm:$0xff]
    %v52 = vld [vmem:[#allocation3 + $0x8] sm:$0xff]
    %v53 = vld [vmem:[#allocation3 + $0x10] sm:$0xff]
    %v54 = vld [vmem:[#allocation3 + $0x18] sm:$0xff]
    %v55 = vld [vmem:[#allocation3 + $0x20] sm:$0xff]
    %v56 = vld [vmem:[#allocation3 + $0x28] sm:$0xff]
    %v57 = vld [vmem:[#allocation3 + $0x30] sm:$0xff]
    %v58 = vld [vmem:[#allocation3 + $0x38] sm:$0xff]
    %v59 = vld [vmem:[#allocation3 + $0x40] sm:$0xff]
    %v60 = vld [vmem:[#allocation3 + $0x48] sm:$0xff]
    %v61 = vld [vmem:[#allocation3 + $0x50] sm:$0xff]
    %v62 = vld [vmem:[#allocation3 + $0x58] sm:$0xff]
    %v63 = vld [vmem:[#allocation3 + $0x60] sm:$0xff]
    %v64 = vld [vmem:[#allocation3 + $0x68] sm:$0xff]
    %v65 = vld [vmem:[#allocation3 + $0x70] sm:$0xff]
    %v66 = vld [vmem:[#allocation3 + $0x78] sm:$0xff]
    %v67 = vpack.c.bf16 %v52, %v51
    %v68 = vpack.c.bf16 %v54, %v53
    %v69 = vpack.c.bf16 %v56, %v55
    %v70 = vpack.c.bf16 %v58, %v57
    %v71 = vpack.c.bf16 %v60, %v59
    %v72 = vpack.c.bf16 %v62, %v61
    %v73 = vpack.c.bf16 %v64, %v63
    %v74 = vpack.c.bf16 %v66, %v65
    %v75 = vld [vmem:[#allocation6] sm:$0xf]
    %v76 = vld [vmem:[#allocation6 + $0x4] sm:$0xf]
    %v77 = vld [vmem:[#allocation6 + $0x8] sm:$0xf]
    %v78 = vld [vmem:[%s2] sm:$0x1]
    %v80 = vlaneseq
    %v81 = vshrl.u32 %v80, 7
    %v82 = vsub.s32 0, %v81
    %v83 = vrot.slane %v78, %v82
    %v88 = vunpack.c.l.b16 %v75
    %v89 = vunpack.c.l.b16 %v76
    %v90 = vunpack.c.l.b16 %v77
    %v91 = vpack.c.b16 %v89, %v88
    %v92 = vpack.c.b16 %v90, %v90
    %vm94 = vcmask 187392
    %v96 = vsel %vm94, %v67, 0
    %v99 = vsel %vm94, %v68, 0
    %v102 = vsel %vm94, %v69, 0
    %v105 = vsel %vm94, %v70, 0
    %v108 = vsel %vm94, %v71, 0
    %v111 = vsel %vm94, %v72, 0
    %v114 = vsel %vm94, %v73, 0
    %v117 = vsel %vm94, %v74, 0
    %vm119 = vcmask 1042432
    %vm120 = vcmask 1043456
    %v121 = vsel %vm119, 4294967295, 65535
    %v122 = vsel %vm120, %v121, 0
    %v124 = vand.u32 %v92, %v122
    %126 = vmatprep.subr.bf16.mxu0 0
    %127 = vmatpush1.bf16.msra.mxu0 0
    %128 = vmatprep.subr.bf16.mxu0 0
    %129 = vmatpush1.bf16.msra.mxu0 0
    %130 = vmatprep.subr.bf16.mxu0 0
    %131 = vmatpush1.bf16.msra.mxu0 0
    %132 = vmatprep.subr.bf16.mxu0 0
    %133 = vmatpush1.bf16.msra.mxu0 0
    %134 = vmatprep.subr.bf16.mxu0 0
    %135 = vmatpush1.bf16.msra.mxu0 0
    %136 = vmatprep.subr.bf16.mxu0 0
    %137 = vmatpush1.bf16.msra.mxu0 0
    %138 = vmatprep.subr.bf16.mxu0 0
    %139 = vmatpush1.bf16.msra.mxu0 %v124
    %140 = vmatprep.subr.bf16.mxu0 0
    %141 = vmatpush1.bf16.msra.mxu0 %v91
    %142 = vmatprep.subr.bf16.mxu0 0
    %143 = vmatpush2.bf16.msra.mxu0 0
    %144 = vmatprep.subr.bf16.mxu0 0
    %145 = vmatpush2.bf16.msra.mxu0 0
    %146 = vmatprep.subr.bf16.mxu0 0
    %147 = vmatpush2.bf16.msra.mxu0 0
    %148 = vmatprep.subr.bf16.mxu0 0
    %149 = vmatpush2.bf16.msra.mxu0 0
    %150 = vmatprep.subr.bf16.mxu0 0
    %151 = vmatpush2.bf16.msra.mxu0 0
    %152 = vmatprep.subr.bf16.mxu0 0
    %153 = vmatpush2.bf16.msra.mxu0 0
    %154 = vmatprep.subr.bf16.mxu0 0
    %155 = vmatpush2.bf16.msra.mxu0 0
    %156 = vmatprep.subr.bf16.mxu0 0
    %157 = vmatpush2.bf16.msra.mxu0 0
    %158 = vmatprep.mubr.bf16.mxu0 0
    %159 = vmatmul.mubr.bf16.gmra.mxu0 %v96
    %v160 = vpop.f32.mrf.mxu0
    %v161 = vadd.f32 %v83, %v160
    %v162 = vpop.f32.mrf.mxu0
    %v163 = vpop.f32.mrf.mxu0
    %v164 = vadd.f32 %v83, %v163
    %v165 = vpop.f32.mrf.mxu0
    %166 = vmatprep.mubr.bf16.mxu0 0
    %167 = vmatmul.mubr.bf16.gmra.mxu0 %v99
    %v168 = vpop.f32.mrf.mxu0
    %v169 = vadd.f32 %v83, %v168
    %v170 = vpop.f32.mrf.mxu0
    %v171 = vpop.f32.mrf.mxu0
    %v172 = vadd.f32 %v83, %v171
    %v173 = vpop.f32.mrf.mxu0
    %174 = vmatprep.mubr.bf16.mxu0 0
    %175 = vmatmul.mubr.bf16.gmra.mxu0 %v102
    %v176 = vpop.f32.mrf.mxu0
    %v177 = vadd.f32 %v83, %v176
    %v178 = vpop.f32.mrf.mxu0
    %v179 = vpop.f32.mrf.mxu0
    %v180 = vadd.f32 %v83, %v179
    %v181 = vpop.f32.mrf.mxu0
    %182 = vmatprep.mubr.bf16.mxu0 0
    %183 = vmatmul.mubr.bf16.gmra.mxu0 %v105
    %v184 = vpop.f32.mrf.mxu0
    %v185 = vadd.f32 %v83, %v184
    %v186 = vpop.f32.mrf.mxu0
    %v187 = vpop.f32.mrf.mxu0
    %v188 = vadd.f32 %v83, %v187
    %v189 = vpop.f32.mrf.mxu0
    %190 = vmatprep.mubr.bf16.mxu0 0
    %191 = vmatmul.mubr.bf16.gmra.mxu0 %v108
    %v192 = vpop.f32.mrf.mxu0
    %v193 = vadd.f32 %v83, %v192
    %v194 = vpop.f32.mrf.mxu0
    %v195 = vpop.f32.mrf.mxu0
    %v196 = vadd.f32 %v83, %v195
    %v197 = vpop.f32.mrf.mxu0
    %198 = vmatprep.mubr.bf16.mxu0 0
    %199 = vmatmul.mubr.bf16.gmra.mxu0 %v111
    %v200 = vpop.f32.mrf.mxu0
    %v201 = vadd.f32 %v83, %v200
    %v202 = vpop.f32.mrf.mxu0
    %v203 = vpop.f32.mrf.mxu0
    %v204 = vadd.f32 %v83, %v203
    %v205 = vpop.f32.mrf.mxu0
    %206 = vmatprep.mubr.bf16.mxu0 0
    %207 = vmatmul.mubr.bf16.gmra.mxu0 %v114
    %v208 = vpop.f32.mrf.mxu0
    %v209 = vadd.f32 %v83, %v208
    %v210 = vpop.f32.mrf.mxu0
    %v211 = vpop.f32.mrf.mxu0
    %v212 = vadd.f32 %v83, %v211
    %v213 = vpop.f32.mrf.mxu0
    %214 = vmatprep.mubr.bf16.mxu0 0
    %215 = vmatmul.mubr.bf16.gmra.mxu0 %v117
    %v216 = vpop.f32.mrf.mxu0
    %v217 = vadd.f32 %v83, %v216
    %v218 = vpop.f32.mrf.mxu0
    %v219 = vpop.f32.mrf.mxu0
    %v220 = vadd.f32 %v83, %v219
    %v221 = vpop.f32.mrf.mxu0
    %222 = vdwg.mxu0
    %v223 = vmax.f32 %v161, 0.0
    %v224 = vmax.f32 %v164, 0.0
    %v225 = vmax.f32 %v169, 0.0
    %v226 = vmax.f32 %v172, 0.0
    %v227 = vmax.f32 %v177, 0.0
    %v228 = vmax.f32 %v180, 0.0
    %v229 = vmax.f32 %v185, 0.0
    %v230 = vmax.f32 %v188, 0.0
    %v231 = vmax.f32 %v193, 0.0
    %v232 = vmax.f32 %v196, 0.0
    %v233 = vmax.f32 %v201, 0.0
    %v234 = vmax.f32 %v204, 0.0
    %v235 = vmax.f32 %v209, 0.0
    %v236 = vmax.f32 %v212, 0.0
    %v237 = vmax.f32 %v217, 0.0
    %v238 = vmax.f32 %v220, 0.0
    %v239 = vld [vmem:[%s3] sm:$0x1]
    %s240 = sld [smem:[#allocation2]]
    %v241 = vstv %s240
    %vm242 = vcmask 523264
    %v244 = vsel %vm242, %v239, 0
    %v247 = vsel %vm242, %v223, 0
    %v250 = vsel %vm242, %v224, 0
    %v253 = vsel %vm242, %v225, 0
    %v256 = vsel %vm242, %v226, 0
    %v259 = vsel %vm242, %v227, 0
    %v262 = vsel %vm242, %v228, 0
    %v265 = vsel %vm242, %v229, 0
    %v268 = vsel %vm242, %v230, 0
    %v271 = vsel %vm242, %v231, 0
    %v274 = vsel %vm242, %v232, 0
    %v277 = vsel %vm242, %v233, 0
    %v280 = vsel %vm242, %v234, 0
    %v283 = vsel %vm242, %v235, 0
    %v286 = vsel %vm242, %v236, 0
    %v289 = vsel %vm242, %v237, 0
    %v292 = vsel %vm242, %v238, 0
    %294 = vmatprep.subr.mxu0 0.0
    %295 = vmatpush1.xpose.msra.mxu0 %v292
    %296 = vmatprep.subr.mxu0 0.0
    %297 = vmatpush1.xpose.msra.mxu0 %v289
    %298 = vmatprep.subr.mxu0 0.0
    %299 = vmatpush1.xpose.msra.mxu0 %v286
    %300 = vmatprep.subr.mxu0 0.0
    %301 = vmatpush1.xpose.msra.mxu0 %v283
    %302 = vmatprep.subr.mxu0 0.0
    %303 = vmatpush1.xpose.msra.mxu0 %v280
    %304 = vmatprep.subr.mxu0 0.0
    %305 = vmatpush1.xpose.msra.mxu0 %v277
    %306 = vmatprep.subr.mxu0 0.0
    %307 = vmatpush1.xpose.msra.mxu0 %v274
    %308 = vmatprep.subr.mxu0 0.0
    %309 = vmatpush1.xpose.msra.mxu0 %v271
    %310 = vmatprep.subr.mxu0 0.0
    %311 = vmatpush1.xpose.msra.mxu0 %v268
    %312 = vmatprep.subr.mxu0 0.0
    %313 = vmatpush1.xpose.msra.mxu0 %v265
    %314 = vmatprep.subr.mxu0 0.0
    %315 = vmatpush1.xpose.msra.mxu0 %v262
    %316 = vmatprep.subr.mxu0 0.0
    %317 = vmatpush1.xpose.msra.mxu0 %v259
    %318 = vmatprep.subr.mxu0 0.0
    %319 = vmatpush1.xpose.msra.mxu0 %v256
    %320 = vmatprep.subr.mxu0 0.0
    %321 = vmatpush1.xpose.msra.mxu0 %v253
    %322 = vmatprep.subr.mxu0 0.0
    %323 = vmatpush1.xpose.msra.mxu0 %v250
    %324 = vmatprep.subr.mxu0 0.0
    %325 = vmatpush1.xpose.msra.mxu0 %v247
    %326 = vmatprep.subr.mxu0 0.0
    %327 = vmatpush2.xpose.msra.mxu0 0.0
    %328 = vmatprep.subr.mxu0 0.0
    %329 = vmatpush2.xpose.msra.mxu0 0.0
    %330 = vmatprep.subr.mxu0 0.0
    %331 = vmatpush2.xpose.msra.mxu0 0.0
    %332 = vmatprep.subr.mxu0 0.0
    %333 = vmatpush2.xpose.msra.mxu0 0.0
    %334 = vmatprep.subr.mxu0 0.0
    %335 = vmatpush2.xpose.msra.mxu0 0.0
    %336 = vmatprep.subr.mxu0 0.0
    %337 = vmatpush2.xpose.msra.mxu0 0.0
    %338 = vmatprep.subr.mxu0 0.0
    %339 = vmatpush2.xpose.msra.mxu0 0.0
    %340 = vmatprep.subr.mxu0 0.0
    %341 = vmatpush2.xpose.msra.mxu0 0.0
    %342 = vmatprep.subr.mxu0 0.0
    %343 = vmatpush2.xpose.msra.mxu0 0.0
    %344 = vmatprep.subr.mxu0 0.0
    %345 = vmatpush2.xpose.msra.mxu0 0.0
    %346 = vmatprep.subr.mxu0 0.0
    %347 = vmatpush2.xpose.msra.mxu0 0.0
    %348 = vmatprep.subr.mxu0 0.0
    %349 = vmatpush2.xpose.msra.mxu0 0.0
    %350 = vmatprep.subr.mxu0 0.0
    %351 = vmatpush2.xpose.msra.mxu0 0.0
    %352 = vmatprep.subr.mxu0 0.0
    %353 = vmatpush2.xpose.msra.mxu0 0.0
    %354 = vmatprep.subr.mxu0 0.0
    %355 = vmatpush2.xpose.msra.mxu0 0.0
    %356 = vmatprep.subr.mxu0 0.0
    %357 = vmatpush2.xpose.msra.mxu0 0.0
    %358 = vmatprep.mubr.f32.mxu0 0.0
    %359 = vmatmul.mubr.f32.gmra.mxu0 %v244
    %v360 = vpop.f32.mrf.mxu0
    %v361 = vadd.f32 %v241, %v360
    %v362 = vpop.f32.mrf.mxu0
    %363 = vdwg.mxu0
    %v364 = vsub.f32 0.0, %v361
    %v365 = vmul.f32 %v364, 1.442695
    %v366 = vpow.pop %v365
    %v367 = vadd.f32 %v366, 1.0
    %v368 = vrcp.pop %v367
    %v369 = vmul.f32 1.0, %v368
    %370 = vst [vmem:[#allocation8] sm:$0x1] %v369
    // Predicated region
    $region30: #{tpu_custom_call.1} parent=1 // pred_check
      _
    $region31: #{tpu_custom_call.1} parent=1 // pred_check_branch
      %372 = sbr.rel (0) target = $region33
    $region32: #{tpu_custom_call.1} parent=1 // pred_region
      %s374 = ssub.s32 16, 16
      %375 = vsyncadd [#allocation5], %s374
      %s377 = sshll.u32 [#allocation8], 4
      %s378 = int_to_ptr.vmem [resolvable:$true] %s377
      %380 = dma.vmem_to_hbm [thread:$0]  %s378, 16, %s5, [#allocation5]
    $region33: #{tpu_custom_call.1} parent=1 // pred_fallthru
      _
    // Predicated region
    $region34: #{tpu_custom_call.1} parent=1 // pred_check
      _
    $region35: #{tpu_custom_call.1} parent=1 // pred_check_branch
      %382 = sbr.rel (0) target = $region37
    $region36: #{tpu_custom_call.1} parent=1 // pred_region
      %383 = dma.done [#allocation5], 16
    $region37: #{tpu_custom_call.1} parent=1 // pred_fallthru
      _
    %384 = vsyncpa [#allocation4], 1
    %385 = vsyncpa [#allocation7], 1
    %386 = vsyncpa [#allocation5], 1

</llo_original>
